<compile_context>
chip_gen: v7x
topology: tpu7x:2x2x1
jax: 0.10.0
libtpu: 0.0.40
codegen_flags: <defaults>
</compile_context>

<pallas_src>
import jax
import jax.numpy as jnp
from jax import lax
from jax.experimental import pallas as pl
from jax.experimental.pallas import tpu as pltpu


def _commnet_kernel(states_ref, enc_ref, h_last_ref, c_bias_ref,
                    wdec_ref, bdec_ref, out_ref):
    # Encoder: h0 = states @ E^T (contract the input_size dims; no transpose op).
    h0 = lax.dot_general(states_ref[...], enc_ref[...],
                         (((1,), (1,)), ((), ())),
                         preferred_element_type=jnp.float32)            # (A, O)

    # Communication: only the last torch step matters (h is overwritten from
    # (h0, comm) each iteration); C_{S-1} @ comm is the precomputed c_bias.
    h = jnp.tanh(jnp.dot(h_last_ref[...], h0,
                         preferred_element_type=jnp.float32)
                 + c_bias_ref[...])                                      # (A, O)

    # Decoder + per-agent softmax over actions.
    logits = lax.dot_general(h, wdec_ref[...],
                             (((1,), (1,)), ((), ())),
                             preferred_element_type=jnp.float32) + bdec_ref[...]
    m = jnp.max(logits, axis=-1, keepdims=True)
    e = jnp.exp(logits - m)
    s = jnp.sum(e, axis=-1, keepdims=True)
    r = pl.reciprocal(s, approx=True)          # EUP slot (free vs. VPU divide)
    r = r * (2.0 - s * r)                      # one Newton step -> full f32 accuracy
    out_ref[...] = e * r


@jax.jit
def commnet_forward(states, enc_w, h_stack, c_stack, comm, dec_w, dec_b):
    """states: (B, A, input_size); returns (B, A, num_actions) action probs."""
    B, A, input_size = states.shape
    output_size = enc_w.shape[0]
    num_actions = dec_w.shape[0]
    S = h_stack.shape[0]

    # Parameter-only constant: C_{S-1} @ comm.  One tiny op, fused by jit with
    # the pallas_call (no separate HBM round trip), replaces an MXU matmul per
    # episode inside the kernel.
    c_bias = c_stack[S - 1] @ comm                    # (A, O)
    bdec = dec_b[None, :]                             # metadata-only bitcast under jit

    return pl.pallas_call(
        _commnet_kernel,
        out_shape=jax.ShapeDtypeStruct((B, A, num_actions), jnp.float32),
        grid=(B,),
        in_specs=[
            # one episode per grid step (leading batch dim squeezed away)
            pl.BlockSpec((None, A, input_size), lambda b: (b, 0, 0)),
            # shared parameters: constant block index -> DMA'd into VMEM once
            pl.BlockSpec((output_size, input_size), lambda b: (0, 0)),
            # only the LAST communication matrix ever leaves HBM
            pl.BlockSpec((None, A, A), lambda b: (S - 1, 0, 0)),
            pl.BlockSpec((A, output_size), lambda b: (0, 0)),
            pl.BlockSpec((num_actions, output_size), lambda b: (0, 0)),
            pl.BlockSpec((1, num_actions), lambda b: (0, 0)),
        ],
        out_specs=pl.BlockSpec((None, A, num_actions), lambda b: (b, 0, 0)),
        compiler_params=pltpu.CompilerParams(
            dimension_semantics=("parallel",)),   # v7x: shard episodes over both TCs
    )(states, enc_w, h_stack, c_bias, dec_w, bdec)


def commnet_reference(states, enc_w, h_stack, c_stack, comm, dec_w, dec_b):
    # Faithful restatement of the torch forward for ONE episode (runs ALL steps).
    h0 = states @ enc_w.T
    h = h0
    for s in range(h_stack.shape[0]):
        h = jnp.tanh(h_stack[s] @ h0 + c_stack[s] @ comm)
    logits = h @ dec_w.T + dec_b[None, :]
    return jax.nn.softmax(logits, axis=-1)


if __name__ == "__main__":
    # Small shapes consistent with the module; a small batch of episodes.
    batch, num_agents, input_size = 4, 8, 16
    output_size, num_actions, comm_steps = 32, 8, 3

    key = jax.random.PRNGKey(0)
    k_states, k_enc, k_h, k_c, k_comm, k_w, k_b = jax.random.split(key, 7)

    states = jax.random.normal(k_states, (batch, num_agents, input_size), jnp.float32)
    enc_w = jax.random.normal(k_enc, (output_size, input_size), jnp.float32)
    h_stack = jax.random.normal(k_h, (comm_steps, num_agents, num_agents), jnp.float32)
    c_stack = jax.random.normal(k_c, (comm_steps, num_agents, num_agents), jnp.float32)
    # Module initializes comm to zeros; use a nonzero (trained-like) value so the
    # C @ comm contribution is actually exercised by the test.
    comm = jax.random.normal(k_comm, (num_agents, output_size), jnp.float32) * 0.1
    dec_w = jax.random.normal(k_w, (num_actions, output_size), jnp.float32) * 0.1
    dec_b = jax.random.normal(k_b, (num_actions,), jnp.float32) * 0.1

    out = commnet_forward(states, enc_w, h_stack, c_stack, comm, dec_w, dec_b)
    out = jax.block_until_ready(out)

    ref = jax.vmap(lambda st: commnet_reference(
        st, enc_w, h_stack, c_stack, comm, dec_w, dec_b))(states)

    assert out.shape == (batch, num_agents, num_actions)
    assert jnp.allclose(out, ref, atol=2e-5, rtol=2e-5)
    assert jnp.allclose(jnp.sum(out, axis=-1), 1.0, atol=1e-5)

    print("KERNEL_OK")
</pallas_src>

<mosaic_0001>
module attributes {stable_mosaic.version = 11 : i64} {
  func.func @_commnet_kernel(%arg0: i32, %arg1: memref<1x8x16xf32, #tpu.memory_space<vmem>>, %arg2: memref<32x16xf32, #tpu.memory_space<vmem>>, %arg3: memref<1x8x8xf32, #tpu.memory_space<vmem>>, %arg4: memref<8x32xf32, #tpu.memory_space<vmem>>, %arg5: memref<8x32xf32, #tpu.memory_space<vmem>>, %arg6: memref<1x8xf32, #tpu.memory_space<vmem>>, %arg7: memref<1x8x8xf32, #tpu.memory_space<vmem>>) attributes {dimension_semantics = [#tpu.dimension_semantics<parallel>], iteration_bounds = array<i64: 4>, scalar_prefetch = 0 : i64, scratch_operands = 0 : i64, tpu.core_type = #tpu.core_type<tc>, window_params = [{transform_indices = @transform_0, window_bounds = array<i64: 1, 8, 16>}, {pipeline_mode = #tpu.pipeline_mode<synchronous>, transform_indices = @transform_1, window_bounds = array<i64: 32, 16>}, {transform_indices = @transform_2, window_bounds = array<i64: 1, 8, 8>}, {pipeline_mode = #tpu.pipeline_mode<synchronous>, transform_indices = @transform_3, window_bounds = array<i64: 8, 32>}, {pipeline_mode = #tpu.pipeline_mode<synchronous>, transform_indices = @transform_4, window_bounds = array<i64: 8, 32>}, {pipeline_mode = #tpu.pipeline_mode<synchronous>, transform_indices = @transform_5, window_bounds = array<i64: 1, 8>}, {transform_indices = @transform_6, window_bounds = array<i64: 1, 8, 8>}]} {
    %c0 = arith.constant 0 : index
    %c0_0 = arith.constant 0 : index
    %c0_1 = arith.constant 0 : index
    %0 = vector.load %arg1[%c0, %c0_0, %c0_1] : memref<1x8x16xf32, #tpu.memory_space<vmem>>, vector<1x8x16xf32>
    %1 = vector.shape_cast %0 : vector<1x8x16xf32> to vector<8x16xf32>
    %c0_2 = arith.constant 0 : index
    %c0_3 = arith.constant 0 : index
    %2 = vector.load %arg2[%c0_2, %c0_3] : memref<32x16xf32, #tpu.memory_space<vmem>>, vector<32x16xf32>
    %cst = arith.constant dense<0.000000e+00> : vector<8x32xf32>
    %3 = tpu.matmul %1, %2, %cst {dimension_numbers = #tpu.dot_dimension_numbers<[1], [1], [0], [0], [0, 0, 1, 0], [], []>} : vector<8x16xf32>, vector<32x16xf32>, vector<8x32xf32> -> vector<8x32xf32>
    %c0_4 = arith.constant 0 : index
    %c0_5 = arith.constant 0 : index
    %c0_6 = arith.constant 0 : index
    %4 = vector.load %arg3[%c0_4, %c0_5, %c0_6] : memref<1x8x8xf32, #tpu.memory_space<vmem>>, vector<1x8x8xf32>
    %5 = vector.shape_cast %4 : vector<1x8x8xf32> to vector<8x8xf32>
    %cst_7 = arith.constant dense<0.000000e+00> : vector<8x32xf32>
    %6 = tpu.matmul %5, %3, %cst_7 {dimension_numbers = #tpu.dot_dimension_numbers<[1], [0], [0], [1], [0, 0, 1, 1], [], []>} : vector<8x8xf32>, vector<8x32xf32>, vector<8x32xf32> -> vector<8x32xf32>
    %c0_8 = arith.constant 0 : index
    %c0_9 = arith.constant 0 : index
    %7 = vector.load %arg4[%c0_8, %c0_9] : memref<8x32xf32, #tpu.memory_space<vmem>>, vector<8x32xf32>
    %8 = arith.addf %6, %7 : vector<8x32xf32>
    %9 = math.tanh %8 : vector<8x32xf32>
    %c0_10 = arith.constant 0 : index
    %c0_11 = arith.constant 0 : index
    %10 = vector.load %arg5[%c0_10, %c0_11] : memref<8x32xf32, #tpu.memory_space<vmem>>, vector<8x32xf32>
    %cst_12 = arith.constant dense<0.000000e+00> : vector<8x8xf32>
    %11 = tpu.matmul %9, %10, %cst_12 {dimension_numbers = #tpu.dot_dimension_numbers<[1], [1], [0], [0], [0, 0, 1, 0], [], []>} : vector<8x32xf32>, vector<8x32xf32>, vector<8x8xf32> -> vector<8x8xf32>
    %c0_13 = arith.constant 0 : index
    %c0_14 = arith.constant 0 : index
    %12 = vector.load %arg6[%c0_13, %c0_14] : memref<1x8xf32, #tpu.memory_space<vmem>>, vector<1x8xf32>
    %13 = vector.broadcast %12 : vector<1x8xf32> to vector<8x8xf32>
    %14 = arith.addf %11, %13 : vector<8x8xf32>
    %cst_15 = arith.constant dense<0xFF800000> : vector<8xf32>
    %15 = vector.multi_reduction <maximumf>, %14, %cst_15 [1] : vector<8x8xf32> to vector<8xf32>
    %16 = vector.shape_cast %15 : vector<8xf32> to vector<8x1xf32>
    %17 = vector.broadcast %16 : vector<8x1xf32> to vector<8x8xf32>
    %18 = arith.subf %14, %17 : vector<8x8xf32>
    %19 = math.exp %18 : vector<8x8xf32>
    %cst_16 = arith.constant dense<0.000000e+00> : vector<8xf32>
    %20 = vector.multi_reduction <add>, %19, %cst_16 [1] : vector<8x8xf32> to vector<8xf32>
    %21 = vector.shape_cast %20 : vector<8xf32> to vector<8x1xf32>
    %22 = tpu.reciprocal %21 {approx = true} : vector<8x1xf32> -> vector<8x1xf32>
    %23 = arith.mulf %21, %22 : vector<8x1xf32>
    %cst_17 = arith.constant 2.000000e+00 : f32
    %24 = vector.broadcast %cst_17 : f32 to vector<8x1xf32>
    %25 = arith.subf %24, %23 : vector<8x1xf32>
    %26 = arith.mulf %22, %25 : vector<8x1xf32>
    %27 = vector.broadcast %26 : vector<8x1xf32> to vector<8x8xf32>
    %28 = arith.mulf %19, %27 : vector<8x8xf32>
    %c0_18 = arith.constant 0 : index
    %c0_19 = arith.constant 0 : index
    %c0_20 = arith.constant 0 : index
    %29 = vector.load %arg7[%c0_18, %c0_19, %c0_20] : memref<1x8x8xf32, #tpu.memory_space<vmem>>, vector<1x8x8xf32>
    %30 = vector.shape_cast %29 : vector<1x8x8xf32> to vector<8x8xf32>
    %31 = vector.shape_cast %28 : vector<8x8xf32> to vector<1x8x8xf32>
    tpu.vector_store %arg7[%c0_18, %c0_19, %c0_20], %31 {strides = array<i32>} : memref<1x8x8xf32, #tpu.memory_space<vmem>>, vector<1x8x8xf32>,
    return
  }
  func.func @transform_0(%arg0: i32) -> (i32, i32, i32) {
    %c0_i32 = arith.constant 0 : i32
    %c0_i32_0 = arith.constant 0 : i32
    %c0_i32_1 = arith.constant 0 : i32
    return %arg0, %c0_i32, %c0_i32_0 : i32, i32, i32
  }
  func.func @transform_1(%arg0: i32) -> (i32, i32) {
    %c0_i32 = arith.constant 0 : i32
    %c0_i32_0 = arith.constant 0 : i32
    %c0_i32_1 = arith.constant 0 : i32
    return %c0_i32, %c0_i32_0 : i32, i32
  }
  func.func @transform_2(%arg0: i32) -> (i32, i32, i32) {
    %c2_i32 = arith.constant 2 : i32
    %c0_i32 = arith.constant 0 : i32
    %c0_i32_0 = arith.constant 0 : i32
    %c0_i32_1 = arith.constant 0 : i32
    return %c2_i32, %c0_i32, %c0_i32_0 : i32, i32, i32
  }
  func.func @transform_3(%arg0: i32) -> (i32, i32) {
    %c0_i32 = arith.constant 0 : i32
    %c0_i32_0 = arith.constant 0 : i32
    %c0_i32_1 = arith.constant 0 : i32
    return %c0_i32, %c0_i32_0 : i32, i32
  }
  func.func @transform_4(%arg0: i32) -> (i32, i32) {
    %c0_i32 = arith.constant 0 : i32
    %c0_i32_0 = arith.constant 0 : i32
    %c0_i32_1 = arith.constant 0 : i32
    return %c0_i32, %c0_i32_0 : i32, i32
  }
  func.func @transform_5(%arg0: i32) -> (i32, i32) {
    %c0_i32 = arith.constant 0 : i32
    %c0_i32_0 = arith.constant 0 : i32
    %c0_i32_1 = arith.constant 0 : i32
    return %c0_i32, %c0_i32_0 : i32, i32
  }
  func.func @transform_6(%arg0: i32) -> (i32, i32, i32) {
    %c0_i32 = arith.constant 0 : i32
    %c0_i32_0 = arith.constant 0 : i32
    %c0_i32_1 = arith.constant 0 : i32
    return %arg0, %c0_i32, %c0_i32_0 : i32, i32, i32
  }
}

</mosaic_0001>

<llo_original>
// kernel: commnet_forward.1
$region0: #{commnet_forward.1}
  #allocation0 [shape = 'u32[]', space=smem, size = 0x4, offset = 0x4, fixed_abs, tag = 'smem constant byte address 0x4 - core index']
  #allocation1 [shape = 'u32[144,128]{1,0:T(1,128)}', space=vmem, size = 0x12000, scoped, tag = 'internal scratch']
  %s0 = inlined_call_operand.vmem [shape: f32[4,8,16], index: 0, kind: input, shape index: {}]
  %s1 = inlined_call_operand.vmem [shape: f32[32,16], index: 1, kind: input, shape index: {}]
  %s2 = inlined_call_operand.vmem [shape: f32[3,8,8], index: 2, kind: input, shape index: {}]
  %s3 = inlined_call_operand.vmem [shape: f32[8,32], index: 3, kind: input, shape index: {}]
  %s4 = inlined_call_operand.vmem [shape: f32[8,32], index: 4, kind: input, shape index: {}]
  %s5 = inlined_call_operand.vmem [shape: f32[1,8], index: 5, kind: input, shape index: {}]
  %s6 = inlined_call_operand.hbm [shape: f32[4,8,8], index: 6, kind: output, shape index: {}]
  %s7 = sld [smem:[#allocation0]]
  $region57: #{commnet_forward.1} parent=0
    _
  %s9 = ssub.s32 1, %s7
  %s10 = scalar_select 0, %s9, %s7
  $region1: #{commnet_forward.1} parent=0
    #allocation2 [shape = 'u8[8192]{0}', space=vmem, size = 0x2000, scoped, tag = 'output window, operand 0']
    #allocation3 [shape = 's32[2]{0}', space=sflag, size = 0x8, scoped, tag = 'scoped memory for commnet_forward.1']
    %11 = vsyncpa [#allocation3], 0
    %s12 = scalar_lea.sflag [#allocation3], 1
    %13 = vsyncpa %s12, 0
    loop: start=0, step=1, limit=6
    $region2: #{commnet_forward.1} parent=1 // loop_pre_header
      _
    $region3: #{commnet_forward.1} parent=1 // loop_header
      %s15 = sphi 0, %s19
      %p16 = scmp.ge.s32.totalorder %s15, 6
      %s25 = sphi 0, %s27
      %s28 = sphi 0, %s25
      %s29 = sphi 0, %s28
      %s45 = sphi 0, %s29
      %s49 = sphi 0, %s49
      %s51 = sphi 0, %s49
      %s52 = sphi 0, %s51
      %s66 = sphi 0, %s52
      %s70 = sphi 0, %s70
      %s72 = sphi 0, %s70
      %s73 = sphi 0, %s72
      %s87 = sphi 0, %s73
      %s91 = sphi 0, %s91
      %s93 = sphi 0, %s91
      %s94 = sphi 0, %s93
      %s108 = sphi 0, %s94
      %s112 = sphi 0, %s112
      %s114 = sphi 0, %s112
      %s115 = sphi 0, %s114
      %s129 = sphi 0, %s115
      %s133 = sphi 0, %s133
      %s135 = sphi 0, %s133
      %s136 = sphi 0, %s135
      %s150 = sphi 0, %s136
      %s156 = sphi 0, %s158
      %s159 = sphi 0, %s156
      %s160 = sphi 0, %s159
      %s176 = sphi 0, %s160
    $region4: #{commnet_forward.1} parent=1 // loop_header_branch
      %18 = sbr.rel (%p16) target = $region8
    $region5: #{commnet_forward.1} parent=1 // loop_body
      %s20 = ssub.s32 %s15, 1
      %s21 = ssub.s32 %s15, 2
      %s22 = sadd.s32 %s15, 1
      %s23 = ssub.s32 %s15, %s22
      %p24 = scmp.eq.s32.totalorder %s23, 0
      %s26 = sadd.s32 %s25, 1
      %s27 = scalar_select %p24, %s25, %s26
      %p30 = pneg %p24
      %p31 = scmp.eq.s32.totalorder %s15, 3
      %p32 = por %p30, %p31
      %p33 = scmp.ne.s32.totalorder %s25, %s28
      %p34 = scmp.eq.s32.totalorder %s15, 0
      %p35 = por %p33, %p34
      %p36 = scmp.ne.s32.totalorder %s25, %s28
      %p37 = scmp.eq.s32.totalorder %s20, 3
      %p38 = por %p36, %p37
      %p39 = scmp.ne.s32.totalorder %s28, %s29
      %p40 = scmp.eq.s32.totalorder %s20, 0
      %p41 = por %p39, %p40
      %p42 = scmp.ne.s32.totalorder %s28, %s29
      %p43 = scmp.eq.s32.totalorder %s21, 3
      %p44 = por %p42, %p43
      %p46 = scmp.ne.s32.totalorder %s29, %s45
      %p47 = scmp.eq.s32.totalorder %s21, 0
      %p48 = por %p46, %p47
      %s50 = sadd.s32 %s49, 1
      %p53 = scmp.eq.s32.totalorder %s15, 3
      %p54 = scmp.ne.s32.totalorder %s49, %s51
      %p55 = scmp.eq.s32.totalorder %s15, 0
      %p56 = por %p54, %p55
      %p57 = scmp.ne.s32.totalorder %s49, %s51
      %p58 = scmp.eq.s32.totalorder %s20, 3
      %p59 = por %p57, %p58
      %p60 = scmp.ne.s32.totalorder %s51, %s52
      %p61 = scmp.eq.s32.totalorder %s20, 0
      %p62 = por %p60, %p61
      %p63 = scmp.ne.s32.totalorder %s51, %s52
      %p64 = scmp.eq.s32.totalorder %s21, 3
      %p65 = por %p63, %p64
      %p67 = scmp.ne.s32.totalorder %s52, %s66
      %p68 = scmp.eq.s32.totalorder %s21, 0
      %p69 = por %p67, %p68
      %s71 = sadd.s32 %s70, 1
      %p74 = scmp.eq.s32.totalorder %s15, 3
      %p75 = scmp.ne.s32.totalorder %s70, %s72
      %p76 = scmp.eq.s32.totalorder %s15, 0
      %p77 = por %p75, %p76
      %p78 = scmp.ne.s32.totalorder %s70, %s72
      %p79 = scmp.eq.s32.totalorder %s20, 3
      %p80 = por %p78, %p79
      %p81 = scmp.ne.s32.totalorder %s72, %s73
      %p82 = scmp.eq.s32.totalorder %s20, 0
      %p83 = por %p81, %p82
      %p84 = scmp.ne.s32.totalorder %s72, %s73
      %p85 = scmp.eq.s32.totalorder %s21, 3
      %p86 = por %p84, %p85
      %p88 = scmp.ne.s32.totalorder %s73, %s87
      %p89 = scmp.eq.s32.totalorder %s21, 0
      %p90 = por %p88, %p89
      %s92 = sadd.s32 %s91, 1
      %p95 = scmp.eq.s32.totalorder %s15, 3
      %p96 = scmp.ne.s32.totalorder %s91, %s93
      %p97 = scmp.eq.s32.totalorder %s15, 0
      %p98 = por %p96, %p97
      %p99 = scmp.ne.s32.totalorder %s91, %s93
      %p100 = scmp.eq.s32.totalorder %s20, 3
      %p101 = por %p99, %p100
      %p102 = scmp.ne.s32.totalorder %s93, %s94
      %p103 = scmp.eq.s32.totalorder %s20, 0
      %p104 = por %p102, %p103
      %p105 = scmp.ne.s32.totalorder %s93, %s94
      %p106 = scmp.eq.s32.totalorder %s21, 3
      %p107 = por %p105, %p106
      %p109 = scmp.ne.s32.totalorder %s94, %s108
      %p110 = scmp.eq.s32.totalorder %s21, 0
      %p111 = por %p109, %p110
      %s113 = sadd.s32 %s112, 1
      %p116 = scmp.eq.s32.totalorder %s15, 3
      %p117 = scmp.ne.s32.totalorder %s112, %s114
      %p118 = scmp.eq.s32.totalorder %s15, 0
      %p119 = por %p117, %p118
      %p120 = scmp.ne.s32.totalorder %s112, %s114
      %p121 = scmp.eq.s32.totalorder %s20, 3
      %p122 = por %p120, %p121
      %p123 = scmp.ne.s32.totalorder %s114, %s115
      %p124 = scmp.eq.s32.totalorder %s20, 0
      %p125 = por %p123, %p124
      %p126 = scmp.ne.s32.totalorder %s114, %s115
      %p127 = scmp.eq.s32.totalorder %s21, 3
      %p128 = por %p126, %p127
      %p130 = scmp.ne.s32.totalorder %s115, %s129
      %p131 = scmp.eq.s32.totalorder %s21, 0
      %p132 = por %p130, %p131
      %s134 = sadd.s32 %s133, 1
      %p137 = scmp.eq.s32.totalorder %s15, 3
      %p138 = scmp.ne.s32.totalorder %s133, %s135
      %p139 = scmp.eq.s32.totalorder %s15, 0
      %p140 = por %p138, %p139
      %p141 = scmp.ne.s32.totalorder %s133, %s135
      %p142 = scmp.eq.s32.totalorder %s20, 3
      %p143 = por %p141, %p142
      %p144 = scmp.ne.s32.totalorder %s135, %s136
      %p145 = scmp.eq.s32.totalorder %s20, 0
      %p146 = por %p144, %p145
      %p147 = scmp.ne.s32.totalorder %s135, %s136
      %p148 = scmp.eq.s32.totalorder %s21, 3
      %p149 = por %p147, %p148
      %p151 = scmp.ne.s32.totalorder %s136, %s150
      %p152 = scmp.eq.s32.totalorder %s21, 0
      %p153 = por %p151, %p152
      %s154 = ssub.s32 %s15, %s22
      %p155 = scmp.eq.s32.totalorder %s154, 0
      %s157 = sadd.s32 %s156, 1
      %s158 = scalar_select %p155, %s156, %s157
      %p161 = pneg %p155
      %p162 = scmp.eq.s32.totalorder %s15, 3
      %p163 = por %p161, %p162
      %p164 = scmp.ne.s32.totalorder %s156, %s159
      %p165 = scmp.eq.s32.totalorder %s15, 0
      %p166 = por %p164, %p165
      %p167 = scmp.ne.s32.totalorder %s156, %s159
      %p168 = scmp.eq.s32.totalorder %s20, 3
      %p169 = por %p167, %p168
      %p170 = scmp.ne.s32.totalorder %s159, %s160
      %p171 = scmp.eq.s32.totalorder %s20, 0
      %p172 = por %p170, %p171
      %p173 = scmp.ne.s32.totalorder %s159, %s160
      %p174 = scmp.eq.s32.totalorder %s21, 3
      %p175 = por %p173, %p174
      %p177 = scmp.ne.s32.totalorder %s160, %s176
      %p178 = scmp.eq.s32.totalorder %s21, 0
      %p179 = por %p177, %p178
      %p180 = scmp.le.s32.totalorder 1, %s15
      %p181 = scmp.lt.s32.totalorder %s15, 5
      %p182 = pnand %p180, %p181
      %p183 = pneg %p182
      // Predicated region
      $region9: #{commnet_forward.1} parent=5 // pred_check
        _
      $region10: #{commnet_forward.1} parent=5 // pred_check_branch
        %185 = sbr.rel (%p182) target = $region12
      $region11: #{commnet_forward.1} parent=5 // pred_region
        %s186 = ssub.s32 %s15, 1
        // Predicated region
        $region13: #{commnet_forward.1} parent=11 // pred_check
          %p187 = pneg %p62
        $region14: #{commnet_forward.1} parent=11 // pred_check_branch
          %189 = sbr.rel (%p187) target = $region16
        $region15: #{commnet_forward.1} parent=11 // pred_region
          _
        $region16: #{commnet_forward.1} parent=11 // pred_fallthru
          _
        // Predicated region
        $region17: #{commnet_forward.1} parent=11 // pred_check
          %p190 = pneg %p83
        $region18: #{commnet_forward.1} parent=11 // pred_check_branch
          %192 = sbr.rel (%p190) target = $region20
        $region19: #{commnet_forward.1} parent=11 // pred_region
          %s193 = scalar_lea.vmem %s2, 16
        $region20: #{commnet_forward.1} parent=11 // pred_fallthru
          _
        // Predicated region
        $region21: #{commnet_forward.1} parent=11 // pred_check
          %p194 = pneg %p104
        $region22: #{commnet_forward.1} parent=11 // pred_check_branch
          %196 = sbr.rel (%p194) target = $region24
        $region23: #{commnet_forward.1} parent=11 // pred_region
          _
        $region24: #{commnet_forward.1} parent=11 // pred_fallthru
          _
        // Predicated region
        $region25: #{commnet_forward.1} parent=11 // pred_check
          %p197 = pneg %p125
        $region26: #{commnet_forward.1} parent=11 // pred_check_branch
          %199 = sbr.rel (%p197) target = $region28
        $region27: #{commnet_forward.1} parent=11 // pred_region
          _
        $region28: #{commnet_forward.1} parent=11 // pred_fallthru
          _
        // Predicated region
        $region29: #{commnet_forward.1} parent=11 // pred_check
          %p200 = pneg %p146
        $region30: #{commnet_forward.1} parent=11 // pred_check_branch
          %202 = sbr.rel (%p200) target = $region32
        $region31: #{commnet_forward.1} parent=11 // pred_region
          _
        $region32: #{commnet_forward.1} parent=11 // pred_fallthru
          _
      $region12: #{commnet_forward.1} parent=5 // pred_fallthru
        _
      %p203 = scmp.lt.s32.totalorder %s15, 4
      // Predicated region
      $region33: #{commnet_forward.1} parent=5 // pred_check
        %p204 = pneg %p203
      $region34: #{commnet_forward.1} parent=5 // pred_check_branch
        %206 = sbr.rel (%p204) target = $region36
      $region35: #{commnet_forward.1} parent=5 // pred_region
        // Predicated region
        $region37: #{commnet_forward.1} parent=35 // pred_check
          %p207 = pneg %p35
        $region38: #{commnet_forward.1} parent=35 // pred_check_branch
          %209 = sbr.rel (%p207) target = $region40
        $region39: #{commnet_forward.1} parent=35 // pred_region
          %p210 = scmp.lt.s32.totalorder %s15, 3
          %s211 = scalar_select %p210, %s15, 3
          %s212 = smul.addr %s211, 8
          %s213 = scalar_lea.vmem %s0, %s212
        $region40: #{commnet_forward.1} parent=35 // pred_fallthru
          _
      $region36: #{commnet_forward.1} parent=5 // pred_fallthru
        _
      %p214 = scmp.le.s32.totalorder 1, %s15
      %p215 = scmp.lt.s32.totalorder %s15, 5
      %p216 = pnand %p214, %p215
      %p217 = pneg %p216
      // Predicated region
      $region41: #{commnet_forward.1} parent=5 // pred_check
        _
      $region42: #{commnet_forward.1} parent=5 // pred_check_branch
        %219 = sbr.rel (%p216) target = $region44
      $region43: #{commnet_forward.1} parent=5 // pred_region
        %s220 = ssub.s32 %s15, 1
        %p221 = scmp.lt.s32.totalorder %s20, 3
        %s222 = scalar_select %p221, %s20, 3
        %s223 = smul.addr %s222, 8
        %s224 = scalar_lea.vmem %s0, %s223
        %p225 = pneg %p41
        %p226 = pneg %p38
        %p227 = pneg %p62
        %p228 = pneg %p59
        %s229 = scalar_lea.vmem %s2, 16
        %p230 = pneg %p83
        %p231 = pneg %p80
        %p232 = pneg %p104
        %p233 = pneg %p101
        %p234 = pneg %p125
        %p235 = pneg %p122
        %p236 = pneg %p146
        %p237 = pneg %p143
        %p238 = pneg %p172
        %p239 = pneg %p169
        %s240 = sand.u32 %s159, 1
        %s241 = scalar_lea.sflag [#allocation3], %s240
        %s242 = sand.u32 %s159, 1
        %s243 = smul.addr %s242, 8
        %s244 = scalar_lea.vmem [#allocation2], %s243
        %p245 = scmp.lt.s32.totalorder %s20, 3
        %s246 = scalar_select %p245, %s20, 3
        %s247 = smul.addr %s246, 8
        %s248 = scalar_lea.vmem %s0, %s247
        %s249 = scalar_lea.vmem %s2, 16
        %v250 = vld [vmem:[%s248] sm:$0xff]
        %v251 = vld [vmem:[%s1] sm:$0xff]
        %v252 = vld [vmem:[%s1 + $0x8] sm:$0xff]
        %v253 = vld [vmem:[%s1 + $0x10] sm:$0xff]
        %v254 = vld [vmem:[%s1 + $0x18] sm:$0xff]
        %vm255 = vcmask 130048
        %v257 = vsel %vm255, %v250, 0
        %v260 = vsel %vm255, %v251, 0
        %v263 = vsel %vm255, %v252, 0
        %v266 = vsel %vm255, %v253, 0
        %v269 = vsel %vm255, %v254, 0
        %271 = vmatprep.subr.mxu0 0.0
        %272 = vmatpush1.xpose.msra.mxu0 %v260
        %273 = vmatprep.subr.mxu0 0.0
        %274 = vmatpush1.xpose.msra.mxu0 %v263
        %275 = vmatprep.subr.mxu0 0.0
        %276 = vmatpush1.xpose.msra.mxu0 %v266
        %277 = vmatprep.subr.mxu0 0.0
        %278 = vmatpush1.xpose.msra.mxu0 %v269
        %279 = vmatprep.subr.mxu0 0.0
        %280 = vmatpush1.xpose.msra.mxu0 0.0
        %281 = vmatprep.subr.mxu0 0.0
        %282 = vmatpush1.xpose.msra.mxu0 0.0
        %283 = vmatprep.subr.mxu0 0.0
        %284 = vmatpush1.xpose.msra.mxu0 0.0
        %285 = vmatprep.subr.mxu0 0.0
        %286 = vmatpush1.xpose.msra.mxu0 0.0
        %287 = vmatprep.subr.mxu0 0.0
        %288 = vmatpush1.xpose.msra.mxu0 0.0
        %289 = vmatprep.subr.mxu0 0.0
        %290 = vmatpush1.xpose.msra.mxu0 0.0
        %291 = vmatprep.subr.mxu0 0.0
        %292 = vmatpush1.xpose.msra.mxu0 0.0
        %293 = vmatprep.subr.mxu0 0.0
        %294 = vmatpush1.xpose.msra.mxu0 0.0
        %295 = vmatprep.subr.mxu0 0.0
        %296 = vmatpush1.xpose.msra.mxu0 0.0
        %297 = vmatprep.subr.mxu0 0.0
        %298 = vmatpush1.xpose.msra.mxu0 0.0
        %299 = vmatprep.subr.mxu0 0.0
        %300 = vmatpush1.xpose.msra.mxu0 0.0
        %301 = vmatprep.subr.mxu0 0.0
        %302 = vmatpush1.xpose.msra.mxu0 0.0
        %303 = vmatprep.subr.mxu0 0.0
        %304 = vmatpush1.xpose.msra.mxu0 0.0
        %305 = vmatprep.subr.mxu0 0.0
        %306 = vmatpush1.xpose.msra.mxu0 0.0
        %307 = vmatprep.subr.mxu0 0.0
        %308 = vmatpush1.xpose.msra.mxu0 0.0
        %309 = vmatprep.subr.mxu0 0.0
        %310 = vmatpush1.xpose.msra.mxu0 0.0
        %311 = vmatprep.subr.mxu0 0.0
        %312 = vmatpush1.xpose.msra.mxu0 0.0
        %313 = vmatprep.subr.mxu0 0.0
        %314 = vmatpush1.xpose.msra.mxu0 0.0
        %315 = vmatprep.subr.mxu0 0.0
        %316 = vmatpush1.xpose.msra.mxu0 0.0
        %317 = vmatprep.subr.mxu0 0.0
        %318 = vmatpush1.xpose.msra.mxu0 0.0
        %319 = vmatprep.subr.mxu0 0.0
        %320 = vmatpush1.xpose.msra.mxu0 0.0
        %321 = vmatprep.subr.mxu0 0.0
        %322 = vmatpush1.xpose.msra.mxu0 0.0
        %323 = vmatprep.subr.mxu0 0.0
        %324 = vmatpush1.xpose.msra.mxu0 0.0
        %325 = vmatprep.subr.mxu0 0.0
        %326 = vmatpush1.xpose.msra.mxu0 0.0
        %327 = vmatprep.subr.mxu0 0.0
        %328 = vmatpush1.xpose.msra.mxu0 0.0
        %329 = vmatprep.subr.mxu0 0.0
        %330 = vmatpush1.xpose.msra.mxu0 0.0
        %331 = vmatprep.subr.mxu0 0.0
        %332 = vmatpush1.xpose.msra.mxu0 0.0
        %333 = vmatprep.subr.mxu0 0.0
        %334 = vmatpush1.xpose.msra.mxu0 0.0
        %335 = vmatprep.mubr.f32.mxu0 0.0
        %336 = vmatmul.mubr.f32.gmra.mrb[0].mxu0 %v257
        %v337 = vpop.f32.mrb[0].mxu0
        %v338 = vadd.f32 0.0, %v337
        %v339 = vpop.f32.mrb[0].mxu0
        %340 = vdwg.mxu0
        %v341 = vld [vmem:[%s249] sm:$0xff]
        %v342 = vld [vmem:[%s3] sm:$0xff]
        %vm343 = vcmask 64512
        %v345 = vsel %vm343, %v341, 0
        %347 = vmatprep.subr.mxu0 0.0
        %348 = vmatpush1.msra.mxu0 %v338
        %349 = vmatprep.subr.mxu0 0.0
        %350 = vmatpush1.msra.mxu0 0.0
        %351 = vmatprep.subr.mxu0 0.0
        %352 = vmatpush1.msra.mxu0 0.0
        %353 = vmatprep.subr.mxu0 0.0
        %354 = vmatpush1.msra.mxu0 0.0
        %355 = vmatprep.subr.mxu0 0.0
        %356 = vmatpush1.msra.mxu0 0.0
        %357 = vmatprep.subr.mxu0 0.0
        %358 = vmatpush1.msra.mxu0 0.0
        %359 = vmatprep.subr.mxu0 0.0
        %360 = vmatpush1.msra.mxu0 0.0
        %361 = vmatprep.subr.mxu0 0.0
        %362 = vmatpush1.msra.mxu0 0.0
        %363 = vmatprep.subr.mxu0 0.0
        %364 = vmatpush1.msra.mxu0 0.0
        %365 = vmatprep.subr.mxu0 0.0
        %366 = vmatpush1.msra.mxu0 0.0
        %367 = vmatprep.subr.mxu0 0.0
        %368 = vmatpush1.msra.mxu0 0.0
        %369 = vmatprep.subr.mxu0 0.0
        %370 = vmatpush1.msra.mxu0 0.0
        %371 = vmatprep.subr.mxu0 0.0
        %372 = vmatpush1.msra.mxu0 0.0
        %373 = vmatprep.subr.mxu0 0.0
        %374 = vmatpush1.msra.mxu0 0.0
        %375 = vmatprep.subr.mxu0 0.0
        %376 = vmatpush1.msra.mxu0 0.0
        %377 = vmatprep.subr.mxu0 0.0
        %378 = vmatpush1.msra.mxu0 0.0
        %379 = vmatprep.subr.mxu0 0.0
        %380 = vmatpush1.msra.mxu0 0.0
        %381 = vmatprep.subr.mxu0 0.0
        %382 = vmatpush1.msra.mxu0 0.0
        %383 = vmatprep.subr.mxu0 0.0
        %384 = vmatpush1.msra.mxu0 0.0
        %385 = vmatprep.subr.mxu0 0.0
        %386 = vmatpush1.msra.mxu0 0.0
        %387 = vmatprep.subr.mxu0 0.0
        %388 = vmatpush1.msra.mxu0 0.0
        %389 = vmatprep.subr.mxu0 0.0
        %390 = vmatpush1.msra.mxu0 0.0
        %391 = vmatprep.subr.mxu0 0.0
        %392 = vmatpush1.msra.mxu0 0.0
        %393 = vmatprep.subr.mxu0 0.0
        %394 = vmatpush1.msra.mxu0 0.0
        %395 = vmatprep.subr.mxu0 0.0
        %396 = vmatpush1.msra.mxu0 0.0
        %397 = vmatprep.subr.mxu0 0.0
        %398 = vmatpush1.msra.mxu0 0.0
        %399 = vmatprep.subr.mxu0 0.0
        %400 = vmatpush1.msra.mxu0 0.0
        %401 = vmatprep.subr.mxu0 0.0
        %402 = vmatpush1.msra.mxu0 0.0
        %403 = vmatprep.subr.mxu0 0.0
        %404 = vmatpush1.msra.mxu0 0.0
        %405 = vmatprep.subr.mxu0 0.0
        %406 = vmatpush1.msra.mxu0 0.0
        %407 = vmatprep.subr.mxu0 0.0
        %408 = vmatpush1.msra.mxu0 0.0
        %409 = vmatprep.subr.mxu0 0.0
        %410 = vmatpush1.msra.mxu0 0.0
        %411 = vmatprep.mubr.f32.mxu0 0.0
        %412 = vmatmul.mubr.f32.gmra.mrb[0].mxu0 %v345
        %v413 = vpop.f32.mrb[0].mxu0
        %v414 = vadd.f32 %v342, %v413
        %v415 = vpop.f32.mrb[0].mxu0
        %416 = vdwg.mxu0
        %v417 = vtanh.pop %v414
        %v418 = vld [vmem:[%s4] sm:$0xff]
        %v419 = vld [vmem:[%s5] sm:$0x1]
        %v421 = vlaneseq
        %v422 = vshrl.u32 %v421, 7
        %v423 = vsub.s32 0, %v422
        %v424 = vrot.slane %v419, %v423
        %vm426 = vcmask 261120
        %v428 = vsel %vm426, %v417, 0
        %v431 = vsel %vm426, %v418, 0
        %433 = vmatprep.subr.mxu0 0.0
        %434 = vmatpush1.xpose.msra.mxu0 %v431
        %435 = vmatprep.subr.mxu0 0.0
        %436 = vmatpush1.xpose.msra.mxu0 0.0
        %437 = vmatprep.subr.mxu0 0.0
        %438 = vmatpush1.xpose.msra.mxu0 0.0
        %439 = vmatprep.subr.mxu0 0.0
        %440 = vmatpush1.xpose.msra.mxu0 0.0
        %441 = vmatprep.subr.mxu0 0.0
        %442 = vmatpush1.xpose.msra.mxu0 0.0
        %443 = vmatprep.subr.mxu0 0.0
        %444 = vmatpush1.xpose.msra.mxu0 0.0
        %445 = vmatprep.subr.mxu0 0.0
        %446 = vmatpush1.xpose.msra.mxu0 0.0
        %447 = vmatprep.subr.mxu0 0.0
        %448 = vmatpush1.xpose.msra.mxu0 0.0
        %449 = vmatprep.subr.mxu0 0.0
        %450 = vmatpush1.xpose.msra.mxu0 0.0
        %451 = vmatprep.subr.mxu0 0.0
        %452 = vmatpush1.xpose.msra.mxu0 0.0
        %453 = vmatprep.subr.mxu0 0.0
        %454 = vmatpush1.xpose.msra.mxu0 0.0
        %455 = vmatprep.subr.mxu0 0.0
        %456 = vmatpush1.xpose.msra.mxu0 0.0
        %457 = vmatprep.subr.mxu0 0.0
        %458 = vmatpush1.xpose.msra.mxu0 0.0
        %459 = vmatprep.subr.mxu0 0.0
        %460 = vmatpush1.xpose.msra.mxu0 0.0
        %461 = vmatprep.subr.mxu0 0.0
        %462 = vmatpush1.xpose.msra.mxu0 0.0
        %463 = vmatprep.subr.mxu0 0.0
        %464 = vmatpush1.xpose.msra.mxu0 0.0
        %465 = vmatprep.subr.mxu0 0.0
        %466 = vmatpush1.xpose.msra.mxu0 0.0
        %467 = vmatprep.subr.mxu0 0.0
        %468 = vmatpush1.xpose.msra.mxu0 0.0
        %469 = vmatprep.subr.mxu0 0.0
        %470 = vmatpush1.xpose.msra.mxu0 0.0
        %471 = vmatprep.subr.mxu0 0.0
        %472 = vmatpush1.xpose.msra.mxu0 0.0
        %473 = vmatprep.subr.mxu0 0.0
        %474 = vmatpush1.xpose.msra.mxu0 0.0
        %475 = vmatprep.subr.mxu0 0.0
        %476 = vmatpush1.xpose.msra.mxu0 0.0
        %477 = vmatprep.subr.mxu0 0.0
        %478 = vmatpush1.xpose.msra.mxu0 0.0
        %479 = vmatprep.subr.mxu0 0.0
        %480 = vmatpush1.xpose.msra.mxu0 0.0
        %481 = vmatprep.subr.mxu0 0.0
        %482 = vmatpush1.xpose.msra.mxu0 0.0
        %483 = vmatprep.subr.mxu0 0.0
        %484 = vmatpush1.xpose.msra.mxu0 0.0
        %485 = vmatprep.subr.mxu0 0.0
        %486 = vmatpush1.xpose.msra.mxu0 0.0
        %487 = vmatprep.subr.mxu0 0.0
        %488 = vmatpush1.xpose.msra.mxu0 0.0
        %489 = vmatprep.subr.mxu0 0.0
        %490 = vmatpush1.xpose.msra.mxu0 0.0
        %491 = vmatprep.subr.mxu0 0.0
        %492 = vmatpush1.xpose.msra.mxu0 0.0
        %493 = vmatprep.subr.mxu0 0.0
        %494 = vmatpush1.xpose.msra.mxu0 0.0
        %495 = vmatprep.subr.mxu0 0.0
        %496 = vmatpush1.xpose.msra.mxu0 0.0
        %497 = vmatprep.mubr.f32.mxu0 0.0
        %498 = vmatmul.mubr.f32.gmra.mrb[0].mxu0 %v428
        %v499 = vpop.f32.mrb[0].mxu0
        %v500 = vadd.f32 %v424, %v499
        %v501 = vpop.f32.mrb[0].mxu0
        %502 = vdwg.mxu0
        %v503 = vsel %vm343, %v500, -inf
        %504 = vmax.xlane.f32.xlu0 %v503
        %v505 = vpop.xlane.xlu0 %504
        %v506 = vsub.f32 %v500, %v505
        %v507 = vmul.f32 %v506, 1.442695
        %v508 = vpow.pop %v507
        %v509 = vsel %vm343, %v508, 0.0
        %510 = vadd.xlane.f32.xlu0 %v509
        %v511 = vpop.xlane.xlu0 %510
        %v512 = vrcp.pop %v511
        %v513 = vmul.f32 %v511, %v512
        %v514 = vsub.f32 2.0, %v513
        %v515 = vmul.f32 %v512, %v514
        %v516 = vmul.f32 %v508, %v515
        %517 = vst.msk [vmem:[%s244] sm:$0xff] %vm343, %v516
        %s518 = sand.u32 %s159, 1
        %s519 = scalar_lea.sflag [#allocation3], %s518
        %s520 = sand.u32 %s159, 1
        %s521 = smul.addr %s520, 8
        %s522 = scalar_lea.vmem [#allocation2], %s521
        // Predicated region
        $region45: #{commnet_forward.1} parent=43 // pred_check
          %p523 = pneg %p169
        $region46: #{commnet_forward.1} parent=43 // pred_check_branch
          %525 = sbr.rel (%p523) target = $region48
        $region47: #{commnet_forward.1} parent=43 // pred_region
          %s527 = ssub.s32 128, 128
          %528 = vsyncadd %s519, %s527
          %s529 = smul.addr %s20, 128
          %s530 = scalar_lea.hbm %s6, %s529
          %s532 = sshll.u32 %s522, 4
          %s533 = int_to_ptr.vmem [resolvable:$true] %s532
          %535 = dma.vmem_to_hbm [thread:$0]  %s533, 128, %s530, %s519
        $region48: #{commnet_forward.1} parent=43 // pred_fallthru
          _
      $region44: #{commnet_forward.1} parent=5 // pred_fallthru
        _
      %p536 = scmp.le.s32.totalorder 2, %s15
      // Predicated region
      $region49: #{commnet_forward.1} parent=5 // pred_check
        %p537 = pneg %p536
      $region50: #{commnet_forward.1} parent=5 // pred_check_branch
        %539 = sbr.rel (%p537) target = $region52
      $region51: #{commnet_forward.1} parent=5 // pred_region
        %s540 = ssub.s32 %s15, 2
        // Predicated region
        $region53: #{commnet_forward.1} parent=51 // pred_check
          %p541 = pneg %p175
        $region54: #{commnet_forward.1} parent=51 // pred_check_branch
          %543 = sbr.rel (%p541) target = $region56
        $region55: #{commnet_forward.1} parent=51 // pred_region
          %s544 = sand.u32 %s160, 1
          %s545 = scalar_lea.sflag [#allocation3], %s544
          %s546 = sand.u32 %s160, 1
          %s547 = smul.addr %s546, 8
          %s548 = scalar_lea.vmem [#allocation2], %s547
          %549 = dma.done %s545, 128
        $region56: #{commnet_forward.1} parent=51 // pred_fallthru
          _
      $region52: #{commnet_forward.1} parent=5 // pred_fallthru
        _
    $region6: #{commnet_forward.1} parent=1 // loop_footer
      %s19 = sadd.s32 1, %s15
    $region7: #{commnet_forward.1} parent=1 // loop_footer_branch
      %14 = sbr.rel target = $region3
    $region8: #{commnet_forward.1} parent=1 // loop_exit
      _
    %550 = vsyncpa [#allocation3], 1
    %s551 = scalar_lea.sflag [#allocation3], 1
    %552 = vsyncpa %s551, 1

</llo_original>
